<compile_context>
chip_gen: v6e
topology: v6e:2x2x1
jax: 0.10.0
libtpu: 0.0.40
codegen_flags: <defaults>
</compile_context>

<pallas_src>
import jax
import jax.numpy as jnp
from jax.experimental import pallas as pl
from jax.experimental.pallas import tpu as pltpu


def _round_up(x, m):
    return ((x + m - 1) // m) * m


def coxph_kernel(w1_ref, b1_ref, w2_ref, b2_ref, w3t_ref, b3_ref, xT_ref, o_ref):
    # Layer 1 (MXU, bf16 operands, f32 accumulate): (64, D) @ (D, TB) -> (64, TB)
    h1 = jnp.dot(w1_ref[...], xT_ref[...], preferred_element_type=jnp.float32)
    h1 = jnp.maximum(h1 + b1_ref[...], 0.0)                      # f32 bias + ReLU
    # Layer 2 (MXU): (32, 64) @ (64, TB) -> (32, TB); cast h1 to bf16 for the MXU.
    h2 = jnp.dot(w2_ref[...], h1.astype(jnp.bfloat16),
                 preferred_element_type=jnp.float32)
    h2 = jnp.maximum(h2 + b2_ref[...], 0.0)                      # (32, TB) f32
    # Layer 3 off the MXU: (32,1) * (32,TB) broadcast-multiply on the VPU,
    # then a sublane reduction on the XLU.  One output row is not worth an
    # MXU push.
    y = jnp.sum(w3t_ref[...] * h2, axis=0, keepdims=True) + b3_ref[...]
    o_ref[...] = y.astype(o_ref.dtype)                           # (1, TB)


def coxph_forward(x, params, tb=8192):
    """x: (B, input_dim) f32.  params: PyTorch-layout (out, in) weights and
    (out, 1) biases, all f32.  Returns (B, 1) f32."""
    w1, b1, w2, b2, w3, b3 = params
    B, D = x.shape

    # Batch tile: lane-dense (multiple of 128), no bigger than needed for
    # small B, capped at `tb` so intermediates stay small in VMEM.
    b_pad128 = _round_up(B, 128)
    tb_eff = min(tb, b_pad128)
    n_tiles = pl.cdiv(b_pad128, tb_eff)
    if n_tiles > 1 and n_tiles % 2 == 1:
        # v7x megacore: an even tile count lets the "parallel" batch axis
        # split evenly across the two TensorCores (no-op on v5e/v6e).
        n_tiles += 1
        tb_eff = _round_up(pl.cdiv(b_pad128, n_tiles), 128)
    B_pad = n_tiles * tb_eff

    # Feature-major, bf16 input for the MXU; pad only the tail columns (the
    # padded columns produce garbage activations that are sliced off below).
    xT = x.T.astype(jnp.bfloat16)                                # (D, B)
    if B_pad != B:
        xT = jnp.pad(xT, ((0, 0), (0, B_pad - B)))

    # bf16 weights for the two MXU layers; layer-3 weight stays f32 as a
    # (32, 1) column vector for the VPU broadcast path.
    w1b = w1.astype(jnp.bfloat16)
    w2b = w2.astype(jnp.bfloat16)
    w3t = w3.T.astype(jnp.float32)                               # (32, 1)

    out_t = pl.pallas_call(
        coxph_kernel,
        out_shape=jax.ShapeDtypeStruct((1, B_pad), jnp.float32),
        grid_spec=pltpu.PrefetchScalarGridSpec(
            num_scalar_prefetch=0,
            grid=(n_tiles,),
            in_specs=[
                # Weights / biases: full blocks, constant index_map -> stay
                # VMEM-resident across the whole batch grid.
                pl.BlockSpec(w1b.shape, lambda i: (0, 0)),
                pl.BlockSpec(b1.shape, lambda i: (0, 0)),
                pl.BlockSpec(w2b.shape, lambda i: (0, 0)),
                pl.BlockSpec(b2.shape, lambda i: (0, 0)),
                pl.BlockSpec(w3t.shape, lambda i: (0, 0)),
                pl.BlockSpec(b3.shape, lambda i: (0, 0)),
                # x^T tiled along the (lane) batch axis -> double-buffered DMA.
                pl.BlockSpec((D, tb_eff), lambda i: (0, i)),
            ],
            out_specs=pl.BlockSpec((1, tb_eff), lambda i: (0, i)),
        ),
        compiler_params=pltpu.CompilerParams(
            dimension_semantics=("parallel",)),
    )(w1b, b1, w2b, b2, w3t, b3, xT)

    # (1, B_pad) -> (B, 1); drop the padded tail columns.
    return out_t[0, :B].reshape(B, 1)


def init_params(key, input_dim=10):
    """Deterministic init mirroring torch.nn.Linear's default:
    U(-1/sqrt(fan_in), 1/sqrt(fan_in)).  Weights stored PyTorch-style as
    (out_features, in_features); biases as (out_features, 1)."""
    dims = [(input_dim, 64), (64, 32), (32, 1)]
    params = []
    for fan_in, fan_out in dims:
        key, kw, kb = jax.random.split(key, 3)
        bound = 1.0 / jnp.sqrt(fan_in)
        w = jax.random.uniform(kw, (fan_out, fan_in), jnp.float32, -bound, bound)
        b = jax.random.uniform(kb, (fan_out, 1), jnp.float32, -bound, bound)
        params += [w, b]
    return tuple(params)


if __name__ == "__main__":
    input_dim = 10
    batch = 8

    key = jax.random.PRNGKey(0)
    key_x, key_p = jax.random.split(key)
    x = jax.random.normal(key_x, (batch, input_dim), jnp.float32)
    params = init_params(key_p, input_dim)

    out = coxph_forward(x, params)
    jax.block_until_ready(out)

    # Pure-JAX f32 reference (PyTorch semantics: y = x @ W^T + b).
    # Tolerance relaxed because the kernel runs the MXU in bf16 (f32 accumulate).
    w1, b1, w2, b2, w3, b3 = params
    ref = jnp.maximum(x @ w1.T + b1.T, 0.0)
    ref = jnp.maximum(ref @ w2.T + b2.T, 0.0)
    ref = ref @ w3.T + b3.T
    assert out.shape == (batch, 1)
    assert jnp.allclose(out, ref, atol=2e-2, rtol=2e-2)

    print("KERNEL_OK")
</pallas_src>

<mosaic_0001>
module attributes {stable_mosaic.version = 11 : i64} {
  func.func @coxph_kernel(%arg0: i32, %arg1: memref<64x10xbf16, #tpu.memory_space<vmem>>, %arg2: memref<64x1xf32, #tpu.memory_space<vmem>>, %arg3: memref<32x64xbf16, #tpu.memory_space<vmem>>, %arg4: memref<32x1xf32, #tpu.memory_space<vmem>>, %arg5: memref<32x1xf32, #tpu.memory_space<vmem>>, %arg6: memref<1x1xf32, #tpu.memory_space<vmem>>, %arg7: memref<10x128xbf16, #tpu.memory_space<vmem>>, %arg8: memref<1x128xf32, #tpu.memory_space<vmem>>) attributes {dimension_semantics = [#tpu.dimension_semantics<parallel>], iteration_bounds = array<i64: 1>, scalar_prefetch = 0 : i64, scratch_operands = 0 : i64, tpu.core_type = #tpu.core_type<tc>, window_params = [{pipeline_mode = #tpu.pipeline_mode<synchronous>, transform_indices = @transform_0, window_bounds = array<i64: 64, 10>}, {pipeline_mode = #tpu.pipeline_mode<synchronous>, transform_indices = @transform_1, window_bounds = array<i64: 64, 1>}, {pipeline_mode = #tpu.pipeline_mode<synchronous>, transform_indices = @transform_2, window_bounds = array<i64: 32, 64>}, {pipeline_mode = #tpu.pipeline_mode<synchronous>, transform_indices = @transform_3, window_bounds = array<i64: 32, 1>}, {pipeline_mode = #tpu.pipeline_mode<synchronous>, transform_indices = @transform_4, window_bounds = array<i64: 32, 1>}, {pipeline_mode = #tpu.pipeline_mode<synchronous>, transform_indices = @transform_5, window_bounds = array<i64: 1, 1>}, {transform_indices = @transform_6, window_bounds = array<i64: 10, 128>}, {transform_indices = @transform_7, window_bounds = array<i64: 1, 128>}]} {
    %c0 = arith.constant 0 : index
    %c0_0 = arith.constant 0 : index
    %0 = vector.load %arg1[%c0, %c0_0] : memref<64x10xbf16, #tpu.memory_space<vmem>>, vector<64x10xbf16>
    %c0_1 = arith.constant 0 : index
    %c0_2 = arith.constant 0 : index
    %1 = vector.load %arg7[%c0_1, %c0_2] : memref<10x128xbf16, #tpu.memory_space<vmem>>, vector<10x128xbf16>
    %cst = arith.constant dense<0.000000e+00> : vector<64x128xf32>
    %2 = tpu.matmul %0, %1, %cst {dimension_numbers = #tpu.dot_dimension_numbers<[1], [0], [0], [1], [0, 0, 1, 1], [], []>} : vector<64x10xbf16>, vector<10x128xbf16>, vector<64x128xf32> -> vector<64x128xf32>
    %c0_3 = arith.constant 0 : index
    %c0_4 = arith.constant 0 : index
    %3 = vector.load %arg2[%c0_3, %c0_4] : memref<64x1xf32, #tpu.memory_space<vmem>>, vector<64x1xf32>
    %4 = vector.broadcast %3 : vector<64x1xf32> to vector<64x128xf32>
    %5 = arith.addf %2, %4 : vector<64x128xf32>
    %cst_5 = arith.constant 0.000000e+00 : f32
    %6 = vector.broadcast %cst_5 : f32 to vector<64x128xf32>
    %7 = arith.maximumf %5, %6 : vector<64x128xf32>
    %c0_6 = arith.constant 0 : index
    %c0_7 = arith.constant 0 : index
    %8 = vector.load %arg3[%c0_6, %c0_7] : memref<32x64xbf16, #tpu.memory_space<vmem>>, vector<32x64xbf16>
    %9 = arith.truncf %7 : vector<64x128xf32> to vector<64x128xbf16>
    %cst_8 = arith.constant dense<0.000000e+00> : vector<32x128xf32>
    %10 = tpu.matmul %8, %9, %cst_8 {dimension_numbers = #tpu.dot_dimension_numbers<[1], [0], [0], [1], [0, 0, 1, 1], [], []>} : vector<32x64xbf16>, vector<64x128xbf16>, vector<32x128xf32> -> vector<32x128xf32>
    %c0_9 = arith.constant 0 : index
    %c0_10 = arith.constant 0 : index
    %11 = vector.load %arg4[%c0_9, %c0_10] : memref<32x1xf32, #tpu.memory_space<vmem>>, vector<32x1xf32>
    %12 = vector.broadcast %11 : vector<32x1xf32> to vector<32x128xf32>
    %13 = arith.addf %10, %12 : vector<32x128xf32>
    %cst_11 = arith.constant 0.000000e+00 : f32
    %14 = vector.broadcast %cst_11 : f32 to vector<32x128xf32>
    %15 = arith.maximumf %13, %14 : vector<32x128xf32>
    %c0_12 = arith.constant 0 : index
    %c0_13 = arith.constant 0 : index
    %16 = vector.load %arg5[%c0_12, %c0_13] : memref<32x1xf32, #tpu.memory_space<vmem>>, vector<32x1xf32>
    %17 = vector.broadcast %16 : vector<32x1xf32> to vector<32x128xf32>
    %18 = arith.mulf %17, %15 : vector<32x128xf32>
    %cst_14 = arith.constant dense<0.000000e+00> : vector<128xf32>
    %19 = vector.multi_reduction <add>, %18, %cst_14 [0] : vector<32x128xf32> to vector<128xf32>
    %20 = vector.shape_cast %19 : vector<128xf32> to vector<1x128xf32>
    %c0_15 = arith.constant 0 : index
    %c0_16 = arith.constant 0 : index
    %21 = vector.load %arg6[%c0_15, %c0_16] : memref<1x1xf32, #tpu.memory_space<vmem>>, vector<1x1xf32>
    %22 = vector.broadcast %21 : vector<1x1xf32> to vector<1x128xf32>
    %23 = arith.addf %20, %22 : vector<1x128xf32>
    %c0_17 = arith.constant 0 : index
    %c0_18 = arith.constant 0 : index
    %24 = vector.load %arg8[%c0_17, %c0_18] : memref<1x128xf32, #tpu.memory_space<vmem>>, vector<1x128xf32>
    tpu.vector_store %arg8[%c0_17, %c0_18], %23 {strides = array<i32>} : memref<1x128xf32, #tpu.memory_space<vmem>>, vector<1x128xf32>,
    return
  }
  func.func @transform_0(%arg0: i32) -> (i32, i32) {
    %c0_i32 = arith.constant 0 : i32
    %c0_i32_0 = arith.constant 0 : i32
    %c0_i32_1 = arith.constant 0 : i32
    return %c0_i32, %c0_i32_0 : i32, i32
  }
  func.func @transform_1(%arg0: i32) -> (i32, i32) {
    %c0_i32 = arith.constant 0 : i32
    %c0_i32_0 = arith.constant 0 : i32
    %c0_i32_1 = arith.constant 0 : i32
    return %c0_i32, %c0_i32_0 : i32, i32
  }
  func.func @transform_2(%arg0: i32) -> (i32, i32) {
    %c0_i32 = arith.constant 0 : i32
    %c0_i32_0 = arith.constant 0 : i32
    %c0_i32_1 = arith.constant 0 : i32
    return %c0_i32, %c0_i32_0 : i32, i32
  }
  func.func @transform_3(%arg0: i32) -> (i32, i32) {
    %c0_i32 = arith.constant 0 : i32
    %c0_i32_0 = arith.constant 0 : i32
    %c0_i32_1 = arith.constant 0 : i32
    return %c0_i32, %c0_i32_0 : i32, i32
  }
  func.func @transform_4(%arg0: i32) -> (i32, i32) {
    %c0_i32 = arith.constant 0 : i32
    %c0_i32_0 = arith.constant 0 : i32
    %c0_i32_1 = arith.constant 0 : i32
    return %c0_i32, %c0_i32_0 : i32, i32
  }
  func.func @transform_5(%arg0: i32) -> (i32, i32) {
    %c0_i32 = arith.constant 0 : i32
    %c0_i32_0 = arith.constant 0 : i32
    %c0_i32_1 = arith.constant 0 : i32
    return %c0_i32, %c0_i32_0 : i32, i32
  }
  func.func @transform_6(%arg0: i32) -> (i32, i32) {
    %c0_i32 = arith.constant 0 : i32
    %c0_i32_0 = arith.constant 0 : i32
    return %c0_i32, %arg0 : i32, i32
  }
  func.func @transform_7(%arg0: i32) -> (i32, i32) {
    %c0_i32 = arith.constant 0 : i32
    %c0_i32_0 = arith.constant 0 : i32
    return %c0_i32, %arg0 : i32, i32
  }
}

</mosaic_0001>

<llo_original>
// kernel: tpu_custom_call.1
$region0: #{tpu_custom_call.1}
  #allocation0 [shape = 'u32[]', space=smem, size = 0x4, offset = 0x4, fixed_abs, tag = 'smem constant byte address 0x4 - core index']
  #allocation1 [shape = 'u32[144,128]{1,0:T(1,128)}', space=vmem, size = 0x12000, scoped, tag = 'internal scratch']
  #allocation2 [shape = 'f32[1,1]{1,0:T(1,128)S(1)}', space=vmem, size = 0x200, scoped, tag = 'scoped memory for tpu_custom_call.1']
  %s0 = inlined_call_operand.vmem [shape: bf16[64,10], index: 0, kind: input, shape index: {}]
  %s1 = inlined_call_operand.vmem [shape: f32[64,1], index: 1, kind: input, shape index: {}]
  %s2 = inlined_call_operand.vmem [shape: bf16[32,64], index: 2, kind: input, shape index: {}]
  %s3 = inlined_call_operand.vmem [shape: f32[32,1], index: 3, kind: input, shape index: {}]
  %s4 = inlined_call_operand.vmem [shape: f32[32,1], index: 4, kind: input, shape index: {}]
  %s5 = inlined_call_operand.<no memory space> [shape: f32[1,1], index: 5, kind: input, shape index: {}]
  %s6 = inlined_call_operand.vmem [shape: bf16[10,128], index: 6, kind: input, shape index: {}]
  %s7 = inlined_call_operand.hbm [shape: f32[1,128], index: 7, kind: output, shape index: {}]
  %s8 = sld [smem:[#allocation0]]
  $region38: #{tpu_custom_call.1} parent=0
    _
  %s10 = ssub.s32 1, %s8
  %s11 = scalar_select 0, %s10, %s8
  %v12 = vstv %s5
  %13 = vst [vmem:[#allocation2] sm:$0x1] %v12
  $region1: #{tpu_custom_call.1} parent=0
    #allocation3 [shape = 'u8[512]{0}', space=vmem, size = 0x400, scoped, tag = 'output window, operand 0, single buffered']
    #allocation4 [shape = 's32[1]{0}', space=sflag, size = 0x4, scoped, tag = 'scoped memory for tpu_custom_call.1']
    %14 = vsyncpa [#allocation4], 0
    // Predicated region
    $region2: #{tpu_custom_call.1} parent=1 // pred_check
      _
    $region3: #{tpu_custom_call.1} parent=1 // pred_check_branch
      %16 = sbr.rel (0) target = $region5
    $region4: #{tpu_custom_call.1} parent=1 // pred_region
      _
    $region5: #{tpu_custom_call.1} parent=1 // pred_fallthru
      _
    // Predicated region
    $region6: #{tpu_custom_call.1} parent=1 // pred_check
      _
    $region7: #{tpu_custom_call.1} parent=1 // pred_check_branch
      %18 = sbr.rel (0) target = $region9
    $region8: #{tpu_custom_call.1} parent=1 // pred_region
      _
    $region9: #{tpu_custom_call.1} parent=1 // pred_fallthru
      _
    // Predicated region
    $region10: #{tpu_custom_call.1} parent=1 // pred_check
      _
    $region11: #{tpu_custom_call.1} parent=1 // pred_check_branch
      %20 = sbr.rel (0) target = $region13
    $region12: #{tpu_custom_call.1} parent=1 // pred_region
      _
    $region13: #{tpu_custom_call.1} parent=1 // pred_fallthru
      _
    // Predicated region
    $region14: #{tpu_custom_call.1} parent=1 // pred_check
      _
    $region15: #{tpu_custom_call.1} parent=1 // pred_check_branch
      %22 = sbr.rel (0) target = $region17
    $region16: #{tpu_custom_call.1} parent=1 // pred_region
      _
    $region17: #{tpu_custom_call.1} parent=1 // pred_fallthru
      _
    // Predicated region
    $region18: #{tpu_custom_call.1} parent=1 // pred_check
      _
    $region19: #{tpu_custom_call.1} parent=1 // pred_check_branch
      %24 = sbr.rel (0) target = $region21
    $region20: #{tpu_custom_call.1} parent=1 // pred_region
      _
    $region21: #{tpu_custom_call.1} parent=1 // pred_fallthru
      _
    // Predicated region
    $region22: #{tpu_custom_call.1} parent=1 // pred_check
      _
    $region23: #{tpu_custom_call.1} parent=1 // pred_check_branch
      %26 = sbr.rel (0) target = $region25
    $region24: #{tpu_custom_call.1} parent=1 // pred_region
      _
    $region25: #{tpu_custom_call.1} parent=1 // pred_fallthru
      _
    // Predicated region
    $region26: #{tpu_custom_call.1} parent=1 // pred_check
      _
    $region27: #{tpu_custom_call.1} parent=1 // pred_check_branch
      %28 = sbr.rel (0) target = $region29
    $region28: #{tpu_custom_call.1} parent=1 // pred_region
      _
    $region29: #{tpu_custom_call.1} parent=1 // pred_fallthru
      _
    %v30 = vld [vmem:[%s0] sm:$0xf]
    %v31 = vld [vmem:[%s0 + $0x4] sm:$0xf]
    %v32 = vld [vmem:[%s0 + $0x8] sm:$0xf]
    %v33 = vld [vmem:[%s0 + $0xc] sm:$0xf]
    %v34 = vld [vmem:[%s0 + $0x10] sm:$0xf]
    %v35 = vld [vmem:[%s0 + $0x14] sm:$0xf]
    %v36 = vld [vmem:[%s0 + $0x18] sm:$0xf]
    %v37 = vld [vmem:[%s0 + $0x1c] sm:$0xf]
    %v38 = vld [vmem:[%s6] sm:$0xf]
    %v39 = vld [vmem:[%s6 + $0x4] sm:$0x1]
    %v40 = vld [vmem:[%s1] sm:$0xff]
    %v41 = vld [vmem:[%s1 + $0x8] sm:$0xff]
    %v42 = vld [vmem:[%s1 + $0x10] sm:$0xff]
    %v43 = vld [vmem:[%s1 + $0x18] sm:$0xff]
    %v44 = vld [vmem:[%s1 + $0x20] sm:$0xff]
    %v45 = vld [vmem:[%s1 + $0x28] sm:$0xff]
    %v46 = vld [vmem:[%s1 + $0x30] sm:$0xff]
    %v47 = vld [vmem:[%s1 + $0x38] sm:$0xff]
    %49 = vset.pattern.permute.xlu0 0
    %50 = vperm.xlu0 %49, %v40
    %v51 = vpop.permute.xlu0 %50
    %54 = vset.pattern.permute.xlu0 0
    %55 = vperm.xlu0 %54, %v41
    %v56 = vpop.permute.xlu0 %55
    %59 = vset.pattern.permute.xlu0 0
    %60 = vperm.xlu0 %59, %v42
    %v61 = vpop.permute.xlu0 %60
    %64 = vset.pattern.permute.xlu0 0
    %65 = vperm.xlu0 %64, %v43
    %v66 = vpop.permute.xlu0 %65
    %69 = vset.pattern.permute.xlu0 0
    %70 = vperm.xlu0 %69, %v44
    %v71 = vpop.permute.xlu0 %70
    %74 = vset.pattern.permute.xlu0 0
    %75 = vperm.xlu0 %74, %v45
    %v76 = vpop.permute.xlu0 %75
    %79 = vset.pattern.permute.xlu0 0
    %80 = vperm.xlu0 %79, %v46
    %v81 = vpop.permute.xlu0 %80
    %84 = vset.pattern.permute.xlu0 0
    %85 = vperm.xlu0 %84, %v47
    %v86 = vpop.permute.xlu0 %85
    %v96 = vunpack.c.l.b16 %v30
    %v97 = vunpack.c.l.b16 %v31
    %v98 = vunpack.c.l.b16 %v32
    %v99 = vunpack.c.l.b16 %v33
    %v100 = vunpack.c.l.b16 %v34
    %v101 = vunpack.c.l.b16 %v35
    %v102 = vunpack.c.l.b16 %v36
    %v103 = vunpack.c.l.b16 %v37
    %v104 = vpack.c.b16 %v97, %v96
    %v105 = vpack.c.b16 %v99, %v98
    %v106 = vpack.c.b16 %v101, %v100
    %v107 = vpack.c.b16 %v103, %v102
    %v110 = vunpack.c.l.b16 %v38
    %v111 = vunpack.c.l.b16 %v39
    %v112 = vpack.c.b16 %v111, %v110
    %vm113 = vcmask 80896
    %v115 = vsel %vm113, %v104, 0
    %v118 = vsel %vm113, %v105, 0
    %v121 = vsel %vm113, %v106, 0
    %v124 = vsel %vm113, %v107, 0
    %vm126 = vcmask 1044480
    %v128 = vsel %vm126, %v112, 0
    %130 = vmatprep.subr.bf16.mxu0 0
    %131 = vmatpush1.bf16.msra.mxu0 0
    %132 = vmatprep.subr.bf16.mxu0 0
    %133 = vmatpush1.bf16.msra.mxu0 0
    %134 = vmatprep.subr.bf16.mxu0 0
    %135 = vmatpush1.bf16.msra.mxu0 0
    %136 = vmatprep.subr.bf16.mxu0 0
    %137 = vmatpush1.bf16.msra.mxu0 0
    %138 = vmatprep.subr.bf16.mxu0 0
    %139 = vmatpush1.bf16.msra.mxu0 0
    %140 = vmatprep.subr.bf16.mxu0 0
    %141 = vmatpush1.bf16.msra.mxu0 0
    %142 = vmatprep.subr.bf16.mxu0 0
    %143 = vmatpush1.bf16.msra.mxu0 0
    %144 = vmatprep.subr.bf16.mxu0 0
    %145 = vmatpush1.bf16.msra.mxu0 %v128
    %146 = vmatprep.subr.bf16.mxu0 0
    %147 = vmatpush2.bf16.msra.mxu0 0
    %148 = vmatprep.subr.bf16.mxu0 0
    %149 = vmatpush2.bf16.msra.mxu0 0
    %150 = vmatprep.subr.bf16.mxu0 0
    %151 = vmatpush2.bf16.msra.mxu0 0
    %152 = vmatprep.subr.bf16.mxu0 0
    %153 = vmatpush2.bf16.msra.mxu0 0
    %154 = vmatprep.subr.bf16.mxu0 0
    %155 = vmatpush2.bf16.msra.mxu0 0
    %156 = vmatprep.subr.bf16.mxu0 0
    %157 = vmatpush2.bf16.msra.mxu0 0
    %158 = vmatprep.subr.bf16.mxu0 0
    %159 = vmatpush2.bf16.msra.mxu0 0
    %160 = vmatprep.subr.bf16.mxu0 0
    %161 = vmatpush2.bf16.msra.mxu0 0
    %162 = vmatprep.mubr.bf16.mxu0 0
    %163 = vmatmul.mubr.bf16.gmra.mxu0 %v115
    %v164 = vpop.f32.mrf.mxu0
    %v165 = vadd.f32 %v51, %v164
    %v166 = vpop.f32.mrf.mxu0
    %v167 = vpop.f32.mrf.mxu0
    %v168 = vadd.f32 %v56, %v167
    %v169 = vpop.f32.mrf.mxu0
    %170 = vmatprep.mubr.bf16.mxu0 0
    %171 = vmatmul.mubr.bf16.gmra.mxu0 %v118
    %v172 = vpop.f32.mrf.mxu0
    %v173 = vadd.f32 %v61, %v172
    %v174 = vpop.f32.mrf.mxu0
    %v175 = vpop.f32.mrf.mxu0
    %v176 = vadd.f32 %v66, %v175
    %v177 = vpop.f32.mrf.mxu0
    %178 = vmatprep.mubr.bf16.mxu0 0
    %179 = vmatmul.mubr.bf16.gmra.mxu0 %v121
    %v180 = vpop.f32.mrf.mxu0
    %v181 = vadd.f32 %v71, %v180
    %v182 = vpop.f32.mrf.mxu0
    %v183 = vpop.f32.mrf.mxu0
    %v184 = vadd.f32 %v76, %v183
    %v185 = vpop.f32.mrf.mxu0
    %186 = vmatprep.mubr.bf16.mxu0 0
    %187 = vmatmul.mubr.bf16.gmra.mxu0 %v124
    %v188 = vpop.f32.mrf.mxu0
    %v189 = vadd.f32 %v81, %v188
    %v190 = vpop.f32.mrf.mxu0
    %v191 = vpop.f32.mrf.mxu0
    %v192 = vadd.f32 %v86, %v191
    %v193 = vpop.f32.mrf.mxu0
    %194 = vdwg.mxu0
    %v195 = vmax.f32 %v165, 0.0
    %v196 = vmax.f32 %v168, 0.0
    %v197 = vmax.f32 %v173, 0.0
    %v198 = vmax.f32 %v176, 0.0
    %v199 = vmax.f32 %v181, 0.0
    %v200 = vmax.f32 %v184, 0.0
    %v201 = vmax.f32 %v189, 0.0
    %v202 = vmax.f32 %v192, 0.0
    %v203 = vld [vmem:[%s2] sm:$0xf]
    %v204 = vld [vmem:[%s2 + $0x4] sm:$0xf]
    %v205 = vld [vmem:[%s2 + $0x8] sm:$0xf]
    %v206 = vld [vmem:[%s2 + $0xc] sm:$0xf]
    %v207 = vpack.c.bf16 %v196, %v195
    %v208 = vpack.c.bf16 %v198, %v197
    %v209 = vpack.c.bf16 %v200, %v199
    %v210 = vpack.c.bf16 %v202, %v201
    %v211 = vld [vmem:[%s3] sm:$0xff]
    %v212 = vld [vmem:[%s3 + $0x8] sm:$0xff]
    %v213 = vld [vmem:[%s3 + $0x10] sm:$0xff]
    %v214 = vld [vmem:[%s3 + $0x18] sm:$0xff]
    %216 = vset.pattern.permute.xlu0 0
    %217 = vperm.xlu0 %216, %v211
    %v218 = vpop.permute.xlu0 %217
    %221 = vset.pattern.permute.xlu0 0
    %222 = vperm.xlu0 %221, %v212
    %v223 = vpop.permute.xlu0 %222
    %226 = vset.pattern.permute.xlu0 0
    %227 = vperm.xlu0 %226, %v213
    %v228 = vpop.permute.xlu0 %227
    %231 = vset.pattern.permute.xlu0 0
    %232 = vperm.xlu0 %231, %v214
    %v233 = vpop.permute.xlu0 %232
    %v239 = vunpack.c.l.b16 %v203
    %v240 = vunpack.c.l.b16 %v204
    %v241 = vunpack.c.l.b16 %v205
    %v242 = vunpack.c.l.b16 %v206
    %v243 = vpack.c.b16 %v240, %v239
    %v244 = vpack.c.b16 %v242, %v241
    %vm245 = vcmask 523264
    %v247 = vsel %vm245, %v243, 0
    %v250 = vsel %vm245, %v244, 0
    %252 = vmatprep.subr.bf16.mxu0 0
    %253 = vmatpush1.bf16.msra.mxu0 0
    %254 = vmatprep.subr.bf16.mxu0 0
    %255 = vmatpush1.bf16.msra.mxu0 0
    %256 = vmatprep.subr.bf16.mxu0 0
    %257 = vmatpush1.bf16.msra.mxu0 0
    %258 = vmatprep.subr.bf16.mxu0 0
    %259 = vmatpush1.bf16.msra.mxu0 0
    %260 = vmatprep.subr.bf16.mxu0 0
    %261 = vmatpush1.bf16.msra.mxu0 %v210
    %262 = vmatprep.subr.bf16.mxu0 0
    %263 = vmatpush1.bf16.msra.mxu0 %v209
    %264 = vmatprep.subr.bf16.mxu0 0
    %265 = vmatpush1.bf16.msra.mxu0 %v208
    %266 = vmatprep.subr.bf16.mxu0 0
    %267 = vmatpush1.bf16.msra.mxu0 %v207
    %268 = vmatprep.subr.bf16.mxu0 0
    %269 = vmatpush2.bf16.msra.mxu0 0
    %270 = vmatprep.subr.bf16.mxu0 0
    %271 = vmatpush2.bf16.msra.mxu0 0
    %272 = vmatprep.subr.bf16.mxu0 0
    %273 = vmatpush2.bf16.msra.mxu0 0
    %274 = vmatprep.subr.bf16.mxu0 0
    %275 = vmatpush2.bf16.msra.mxu0 0
    %276 = vmatprep.subr.bf16.mxu0 0
    %277 = vmatpush2.bf16.msra.mxu0 0
    %278 = vmatprep.subr.bf16.mxu0 0
    %279 = vmatpush2.bf16.msra.mxu0 0
    %280 = vmatprep.subr.bf16.mxu0 0
    %281 = vmatpush2.bf16.msra.mxu0 0
    %282 = vmatprep.subr.bf16.mxu0 0
    %283 = vmatpush2.bf16.msra.mxu0 0
    %284 = vmatprep.mubr.bf16.mxu0 0
    %285 = vmatmul.mubr.bf16.gmra.mxu0 %v247
    %v286 = vpop.f32.mrf.mxu0
    %v287 = vadd.f32 %v218, %v286
    %v288 = vpop.f32.mrf.mxu0
    %v289 = vpop.f32.mrf.mxu0
    %v290 = vadd.f32 %v223, %v289
    %v291 = vpop.f32.mrf.mxu0
    %292 = vmatprep.mubr.bf16.mxu0 0
    %293 = vmatmul.mubr.bf16.gmra.mxu0 %v250
    %v294 = vpop.f32.mrf.mxu0
    %v295 = vadd.f32 %v228, %v294
    %v296 = vpop.f32.mrf.mxu0
    %v297 = vpop.f32.mrf.mxu0
    %v298 = vadd.f32 %v233, %v297
    %v299 = vpop.f32.mrf.mxu0
    %300 = vdwg.mxu0
    %v301 = vmax.f32 %v287, 0.0
    %v302 = vmax.f32 %v290, 0.0
    %v303 = vmax.f32 %v295, 0.0
    %v304 = vmax.f32 %v298, 0.0
    %v305 = vld [vmem:[%s4] sm:$0xff]
    %v306 = vld [vmem:[%s4 + $0x8] sm:$0xff]
    %v307 = vld [vmem:[%s4 + $0x10] sm:$0xff]
    %v308 = vld [vmem:[%s4 + $0x18] sm:$0xff]
    %310 = vset.pattern.permute.xlu0 0
    %311 = vperm.xlu0 %310, %v305
    %v312 = vpop.permute.xlu0 %311
    %315 = vset.pattern.permute.xlu0 0
    %316 = vperm.xlu0 %315, %v306
    %v317 = vpop.permute.xlu0 %316
    %320 = vset.pattern.permute.xlu0 0
    %321 = vperm.xlu0 %320, %v307
    %v322 = vpop.permute.xlu0 %321
    %325 = vset.pattern.permute.xlu0 0
    %326 = vperm.xlu0 %325, %v308
    %v327 = vpop.permute.xlu0 %326
    %v329 = vmul.f32 %v312, %v301
    %v330 = vmul.f32 %v317, %v302
    %v331 = vmul.f32 %v322, %v303
    %v332 = vmul.f32 %v327, %v304
    %v333 = vadd.f32 %v329, %v330
    %v334 = vadd.f32 %v333, %v331
    %v335 = vadd.f32 %v334, %v332
    %v336 = vrot.slane %v335, 4
    %v337 = vadd.f32 %v335, %v336
    %v338 = vrot.slane %v337, 2
    %v339 = vadd.f32 %v337, %v338
    %v340 = vrot.slane %v339, 1
    %v341 = vadd.f32 %v339, %v340
    %v342 = vld [vmem:[#allocation2] sm:$0x1]
    %344 = vset.pattern.permute.xlu0 0
    %345 = vperm.xlu0 %344, %v342
    %v346 = vpop.permute.xlu0 %345
    %v348 = vlaneseq
    %v349 = vshrl.u32 %v348, 7
    %v350 = vsub.s32 0, %v349
    %v351 = vrot.slane %v346, %v350
    %v352 = vadd.f32 %v341, %v351
    %353 = vst [vmem:[#allocation3] sm:$0x1] %v352
    // Predicated region
    $region30: #{tpu_custom_call.1} parent=1 // pred_check
      _
    $region31: #{tpu_custom_call.1} parent=1 // pred_check_branch
      %355 = sbr.rel (0) target = $region33
    $region32: #{tpu_custom_call.1} parent=1 // pred_region
      %s357 = ssub.s32 16, 16
      %358 = vsyncadd [#allocation4], %s357
      %s360 = sshll.u32 [#allocation3], 4
      %s361 = int_to_ptr.vmem [resolvable:$true] %s360
      %363 = dma.vmem_to_hbm [thread:$0]  %s361, 16, %s7, [#allocation4]
    $region33: #{tpu_custom_call.1} parent=1 // pred_fallthru
      _
    // Predicated region
    $region34: #{tpu_custom_call.1} parent=1 // pred_check
      _
    $region35: #{tpu_custom_call.1} parent=1 // pred_check_branch
      %365 = sbr.rel (0) target = $region37
    $region36: #{tpu_custom_call.1} parent=1 // pred_region
      %366 = dma.done [#allocation4], 16
    $region37: #{tpu_custom_call.1} parent=1 // pred_fallthru
      _
    %367 = vsyncpa [#allocation4], 1

</llo_original>
